<compile_context>
chip_gen: v5e
topology: v5e:2x2
jax: 0.10.0
libtpu: 0.0.40
codegen_flags: <defaults>
</compile_context>

<pallas_src>
import math

import jax
import jax.numpy as jnp
from jax.experimental import pallas as pl
from jax.experimental.pallas import tpu as pltpu


def _offset_scale_kernel(x_ref, gamma_ref, beta_ref, o_ref):
    # Pure VPU elementwise affine; gamma/beta broadcast over the sublane axis.
    # Compute in f32, cast only on the output store.
    x32 = x_ref[...].astype(jnp.float32)
    o_ref[...] = (x32 * gamma_ref[...] + beta_ref[...]).astype(o_ref.dtype)


def _sublane_multiple(dtype) -> int:
    # f32 -> 8, bf16/f16 -> 16, int8/fp8 -> 32 rows per packed vreg.
    itemsize = jnp.dtype(dtype).itemsize
    return max(8, 32 // itemsize)


def _round_up(n: int, m: int) -> int:
    return ((n + m - 1) // m) * m


def _round_down(n: int, m: int) -> int:
    return (n // m) * m


def _chip_config():
    """Returns (per-tile byte budget, scoped vmem limit, force >=2 grid steps)."""
    kind = ""
    try:
        kind = jax.devices()[0].device_kind.lower()
    except Exception:
        pass
    if "v7" in kind:
        # 3.2 TB/s HBM: bigger tiles hide the ~0.35us/step overhead; 2 TCs want
        # a splittable parallel axis.  4x8 MiB double-buffered in+out << 64 MiB.
        return 8 * 1024 * 1024, 48 * 1024 * 1024, True
    # v5e / v6e: 4 MiB tiles already sit near the HBM roofline knee.
    return 4 * 1024 * 1024, 32 * 1024 * 1024, False


def offset_scale(x, gamma, beta):
    """out = x * gamma + beta. x: [..., D], gamma/beta: [D]."""
    orig_shape = x.shape
    D = int(orig_shape[-1])
    dtype = x.dtype
    itemsize = jnp.dtype(dtype).itemsize
    sub = _sublane_multiple(dtype)
    N = int(x.size)
    M = N // D

    # Parameters stay in f32; the kernel computes the affine in f32.
    gamma32 = gamma.astype(jnp.float32)
    beta32 = beta.astype(jnp.float32)

    tile_budget, vmem_limit, want_two_steps = _chip_config()

    def _cost(param_cols):
        return pl.CostEstimate(
            flops=2 * N,
            transcendentals=0,
            bytes_accessed=2 * N * itemsize + 2 * param_cols * 4,
        )

    # ------------------------------------------------------------------
    # Path A (lane-dense fold, copy-free): fold into [rows, L] with L a multiple
    # of both D and 128 -- only when the fold is exact (no padding ever needed).
    # gamma/beta are periodic in D, so tiling them to length L is exact.
    # ------------------------------------------------------------------
    lcm = D * 128 // math.gcd(D, 128)
    if D % 128 != 0 and lcm <= 2048 and N % lcm == 0:
        L = lcm
        while L * 2 <= 2048 and N % (L * 2) == 0:
            L *= 2
        rows = N // L  # exact

        if rows <= sub:
            tile_rows = rows
        else:
            tile_rows = max(sub, _round_down(tile_budget // (L * itemsize), sub))
            if tile_rows >= rows:
                tile_rows = rows
                if want_two_steps:
                    # Split so both v7x TensorCores get a block.
                    tile_rows = _round_up(pl.cdiv(rows, 2), sub)

        grid = (pl.cdiv(rows, tile_rows),)

        x2 = x.reshape(rows, L)
        reps = L // D
        g2 = jnp.tile(gamma32, reps).reshape(1, L)
        b2 = jnp.tile(beta32, reps).reshape(1, L)

        out = pl.pallas_call(
            _offset_scale_kernel,
            out_shape=jax.ShapeDtypeStruct((rows, L), dtype),
            grid_spec=pl.GridSpec(
                grid=grid,
                in_specs=[
                    pl.BlockSpec((tile_rows, L), lambda i: (i, 0)),
                    pl.BlockSpec((1, L), lambda i: (0, 0)),
                    pl.BlockSpec((1, L), lambda i: (0, 0)),
                ],
                out_specs=pl.BlockSpec((tile_rows, L), lambda i: (i, 0)),
            ),
            compiler_params=pltpu.CompilerParams(
                dimension_semantics=("parallel",),
                vmem_limit_bytes=vmem_limit,
            ),
            cost_estimate=_cost(L),
        )(x2, g2, b2)
        return out.reshape(orig_shape)

    # ------------------------------------------------------------------
    # Path B (natural layout, copy-free): keep D on the lane axis.  No padding,
    # no output slicing -- ragged last row-blocks are masked by the pipeline and
    # an unaligned D uses a full-dim lane block.
    # ------------------------------------------------------------------
    x2 = x.reshape(M, D)
    g2 = gamma32.reshape(1, D)
    b2 = beta32.reshape(1, D)

    if D % 128 != 0:
        tile_d = D  # full-dim block (allowed by the (8,128) rule)
    elif D * itemsize * sub <= tile_budget:
        tile_d = D  # full contiguous rows, effectively 1-D grid
    else:
        tile_d = 128
        for cand in (4096, 2048, 1024, 512, 256):
            if D % cand == 0:
                tile_d = cand
                break

    if M <= sub:
        tile_m = M
    else:
        tile_m = max(sub, _round_down(tile_budget // (tile_d * itemsize), sub))
        if tile_m >= M:
            tile_m = M
            if want_two_steps and tile_d == D:
                tile_m = _round_up(pl.cdiv(M, 2), sub)

    grid = (pl.cdiv(M, tile_m), pl.cdiv(D, tile_d))

    out = pl.pallas_call(
        _offset_scale_kernel,
        out_shape=jax.ShapeDtypeStruct((M, D), dtype),
        grid_spec=pl.GridSpec(
            grid=grid,
            in_specs=[
                pl.BlockSpec((tile_m, tile_d), lambda i, j: (i, j)),
                pl.BlockSpec((1, tile_d), lambda i, j: (0, j)),
                pl.BlockSpec((1, tile_d), lambda i, j: (0, j)),
            ],
            out_specs=pl.BlockSpec((tile_m, tile_d), lambda i, j: (i, j)),
        ),
        compiler_params=pltpu.CompilerParams(
            dimension_semantics=("parallel", "parallel"),
            vmem_limit_bytes=vmem_limit,
        ),
        cost_estimate=_cost(D),
    )(x2, g2, b2)
    return out.reshape(orig_shape)


if __name__ == "__main__":
    key = jax.random.PRNGKey(0)
    k1, k2, k3, k4, k5, k6, k7 = jax.random.split(key, 7)

    # --- Module-consistent small shape: x [B, S, D] = [2, 8, 32] (Path A) -----
    B, S, D = 2, 8, 32
    x = jax.random.normal(k1, (B, S, D), dtype=jnp.float32)
    # Parameter init matching nn.Parameter(torch.ones(dim)/torch.zeros(dim)).
    gamma = jnp.ones((D,), dtype=jnp.float32)
    beta = jnp.zeros((D,), dtype=jnp.float32)

    out = jax.block_until_ready(offset_scale(x, gamma, beta))
    ref = x * gamma + beta
    assert out.shape == x.shape
    assert jnp.allclose(out, ref, atol=1e-6), "mismatch (ones/zeros params)"

    # --- Non-trivial params, same shape (Path A, lane-fold) -------------------
    gamma_r = jax.random.normal(k2, (D,), dtype=jnp.float32)
    beta_r = jax.random.normal(k3, (D,), dtype=jnp.float32)
    out_r = jax.block_until_ready(offset_scale(x, gamma_r, beta_r))
    ref_r = x * gamma_r + beta_r
    assert jnp.allclose(out_r, ref_r, atol=1e-5), "mismatch (random params)"

    # --- 128-aligned feature dim (Path B, full-row blocks) --------------------
    D2 = 256
    x_big = jax.random.normal(k4, (B, S, D2), dtype=jnp.float32)
    gamma_b = jnp.linspace(0.5, 1.5, D2, dtype=jnp.float32)
    beta_b = jnp.linspace(-1.0, 1.0, D2, dtype=jnp.float32)
    out_b = jax.block_until_ready(offset_scale(x_big, gamma_b, beta_b))
    ref_b = x_big * gamma_b + beta_b
    assert jnp.allclose(out_b, ref_b, atol=1e-5), "mismatch (aligned-D path)"

    # --- Unaligned feature dim / uneven rows (Path B, no padding, no slicing) -
    D3 = 160
    x_odd = jax.random.normal(k5, (3, 7, D3), dtype=jnp.float32)
    gamma_o = jax.random.normal(k6, (D3,), dtype=jnp.float32)
    beta_o = jax.random.normal(k7, (D3,), dtype=jnp.float32)
    out_o = jax.block_until_ready(offset_scale(x_odd, gamma_o, beta_o))
    ref_o = x_odd * gamma_o + beta_o
    assert jnp.allclose(out_o, ref_o, atol=1e-5), "mismatch (unaligned-D path)"

    print("KERNEL_OK")
</pallas_src>

<mosaic_0001>
module attributes {stable_mosaic.version = 11 : i64} {
  func.func @_offset_scale_kernel(%arg0: i32, %arg1: memref<1x512xf32, #tpu.memory_space<vmem>>, %arg2: memref<1x512xf32, #tpu.memory_space<vmem>>, %arg3: memref<1x512xf32, #tpu.memory_space<vmem>>, %arg4: memref<1x512xf32, #tpu.memory_space<vmem>>) attributes {dimension_semantics = [#tpu.dimension_semantics<parallel>], iteration_bounds = array<i64: 1>, scalar_prefetch = 0 : i64, scratch_operands = 0 : i64, tpu.core_type = #tpu.core_type<tc>, window_params = [{transform_indices = @transform_0, window_bounds = array<i64: 1, 512>}, {pipeline_mode = #tpu.pipeline_mode<synchronous>, transform_indices = @transform_1, window_bounds = array<i64: 1, 512>}, {pipeline_mode = #tpu.pipeline_mode<synchronous>, transform_indices = @transform_2, window_bounds = array<i64: 1, 512>}, {transform_indices = @transform_3, window_bounds = array<i64: 1, 512>}]} {
    %c0 = arith.constant 0 : index
    %c0_0 = arith.constant 0 : index
    %0 = vector.load %arg1[%c0, %c0_0] : memref<1x512xf32, #tpu.memory_space<vmem>>, vector<1x512xf32>
    %c0_1 = arith.constant 0 : index
    %c0_2 = arith.constant 0 : index
    %1 = vector.load %arg2[%c0_1, %c0_2] : memref<1x512xf32, #tpu.memory_space<vmem>>, vector<1x512xf32>
    %2 = arith.mulf %0, %1 : vector<1x512xf32>
    %c0_3 = arith.constant 0 : index
    %c0_4 = arith.constant 0 : index
    %3 = vector.load %arg3[%c0_3, %c0_4] : memref<1x512xf32, #tpu.memory_space<vmem>>, vector<1x512xf32>
    %4 = arith.addf %2, %3 : vector<1x512xf32>
    %c0_5 = arith.constant 0 : index
    %c0_6 = arith.constant 0 : index
    %5 = vector.load %arg4[%c0_5, %c0_6] : memref<1x512xf32, #tpu.memory_space<vmem>>, vector<1x512xf32>
    tpu.vector_store %arg4[%c0_5, %c0_6], %4 {strides = array<i32>} : memref<1x512xf32, #tpu.memory_space<vmem>>, vector<1x512xf32>,
    return
  }
  func.func @transform_0(%arg0: i32) -> (i32, i32) {
    %c0_i32 = arith.constant 0 : i32
    %c0_i32_0 = arith.constant 0 : i32
    return %arg0, %c0_i32 : i32, i32
  }
  func.func @transform_1(%arg0: i32) -> (i32, i32) {
    %c0_i32 = arith.constant 0 : i32
    %c0_i32_0 = arith.constant 0 : i32
    %c0_i32_1 = arith.constant 0 : i32
    return %c0_i32, %c0_i32_0 : i32, i32
  }
  func.func @transform_2(%arg0: i32) -> (i32, i32) {
    %c0_i32 = arith.constant 0 : i32
    %c0_i32_0 = arith.constant 0 : i32
    %c0_i32_1 = arith.constant 0 : i32
    return %c0_i32, %c0_i32_0 : i32, i32
  }
  func.func @transform_3(%arg0: i32) -> (i32, i32) {
    %c0_i32 = arith.constant 0 : i32
    %c0_i32_0 = arith.constant 0 : i32
    return %arg0, %c0_i32 : i32, i32
  }
}

</mosaic_0001>

<llo_original>
// kernel: tpu_custom_call.1
$region0: #{tpu_custom_call.1}
  #allocation0 [shape = 'u32[]', space=smem, size = 0x4, offset = 0x4, fixed_abs, tag = 'smem constant byte address 0x4 - core index']
  #allocation1 [shape = 'u32[72,128]{1,0:T(1,128)}', space=vmem, size = 0x9000, scoped, tag = 'internal scratch']
  %s0 = inlined_call_operand.hbm [shape: f32[1,512], index: 0, kind: input, shape index: {}]
  %s1 = inlined_call_operand.hbm [shape: f32[1,512], index: 1, kind: input, shape index: {}]
  %s2 = inlined_call_operand.hbm [shape: f32[1,512], index: 2, kind: input, shape index: {}]
  %s3 = inlined_call_operand.hbm [shape: f32[1,512], index: 3, kind: output, shape index: {}]
  %s4 = sld [smem:[#allocation0]]
  $region34: #{tpu_custom_call.1} parent=0
    _
  %s6 = ssub.s32 1, %s4
  %s7 = scalar_select 0, %s6, %s4
  $region1: #{tpu_custom_call.1} parent=0
    #allocation2 [shape = 'u8[2048]{0}', space=vmem, size = 0x800, scoped, tag = 'input window, operand 0, single buffered']
    #allocation3 [shape = 's32[1]{0}', space=sflag, size = 0x4, scoped, tag = 'scoped memory for tpu_custom_call.1']
    #allocation4 [shape = 's32[1]{0}', space=sflag, size = 0x4, scoped, tag = 'scoped memory for tpu_custom_call.1']
    #allocation5 [shape = 'u8[2048]{0}', space=vmem, size = 0x800, scoped, tag = 'input window, operand 1, single buffered']
    #allocation6 [shape = 's32[1]{0}', space=sflag, size = 0x4, scoped, tag = 'scoped memory for tpu_custom_call.1']
    #allocation7 [shape = 'u8[2048]{0}', space=vmem, size = 0x800, scoped, tag = 'input window, operand 2, single buffered']
    #allocation8 [shape = 'u8[2048]{0}', space=vmem, size = 0x800, scoped, tag = 'output window, operand 0, single buffered']
    %8 = vsyncpa [#allocation3], 0
    %9 = vsyncpa [#allocation6], 0
    %10 = vsyncpa [#allocation4], 0
    // Predicated region
    $region2: #{tpu_custom_call.1} parent=1 // pred_check
      _
    $region3: #{tpu_custom_call.1} parent=1 // pred_check_branch
      %12 = sbr.rel (0) target = $region5
    $region4: #{tpu_custom_call.1} parent=1 // pred_region
      %14 = vsyncadd [#allocation3], 0
      %s16 = sshll.u32 %s0, 4
      %s17 = int_to_ptr.hbm [resolvable:$true] %s16
      %s18 = sshll.u32 [#allocation2], 4
      %s19 = int_to_ptr.vmem [resolvable:$true] %s18
      %21 = dma.hbm_to_vmem [thread:$0]  %s17, 64, %s19, [#allocation3]
    $region5: #{tpu_custom_call.1} parent=1 // pred_fallthru
      _
    // Predicated region
    $region6: #{tpu_custom_call.1} parent=1 // pred_check
      _
    $region7: #{tpu_custom_call.1} parent=1 // pred_check_branch
      %23 = sbr.rel (0) target = $region9
    $region8: #{tpu_custom_call.1} parent=1 // pred_region
      %25 = vsyncadd [#allocation6], 0
      %s27 = sshll.u32 %s1, 4
      %s28 = int_to_ptr.hbm [resolvable:$true] %s27
      %s29 = sshll.u32 [#allocation5], 4
      %s30 = int_to_ptr.vmem [resolvable:$true] %s29
      %32 = dma.hbm_to_vmem [thread:$0]  %s28, 64, %s30, [#allocation6]
    $region9: #{tpu_custom_call.1} parent=1 // pred_fallthru
      _
    // Predicated region
    $region10: #{tpu_custom_call.1} parent=1 // pred_check
      _
    $region11: #{tpu_custom_call.1} parent=1 // pred_check_branch
      %34 = sbr.rel (0) target = $region13
    $region12: #{tpu_custom_call.1} parent=1 // pred_region
      %36 = vsyncadd [#allocation6], 0
      %s38 = sshll.u32 %s2, 4
      %s39 = int_to_ptr.hbm [resolvable:$true] %s38
      %s40 = sshll.u32 [#allocation7], 4
      %s41 = int_to_ptr.vmem [resolvable:$true] %s40
      %43 = dma.hbm_to_vmem [thread:$0]  %s39, 64, %s41, [#allocation6]
    $region13: #{tpu_custom_call.1} parent=1 // pred_fallthru
      _
    // Predicated region
    $region14: #{tpu_custom_call.1} parent=1 // pred_check
      _
    $region15: #{tpu_custom_call.1} parent=1 // pred_check_branch
      %45 = sbr.rel (0) target = $region17
    $region16: #{tpu_custom_call.1} parent=1 // pred_region
      %47 = dma.done [#allocation3], 64
    $region17: #{tpu_custom_call.1} parent=1 // pred_fallthru
      _
    // Predicated region
    $region18: #{tpu_custom_call.1} parent=1 // pred_check
      _
    $region19: #{tpu_custom_call.1} parent=1 // pred_check_branch
      %49 = sbr.rel (0) target = $region21
    $region20: #{tpu_custom_call.1} parent=1 // pred_region
      %51 = dma.done [#allocation6], 64
    $region21: #{tpu_custom_call.1} parent=1 // pred_fallthru
      _
    // Predicated region
    $region22: #{tpu_custom_call.1} parent=1 // pred_check
      _
    $region23: #{tpu_custom_call.1} parent=1 // pred_check_branch
      %53 = sbr.rel (0) target = $region25
    $region24: #{tpu_custom_call.1} parent=1 // pred_region
      %55 = dma.done [#allocation6], 64
    $region25: #{tpu_custom_call.1} parent=1 // pred_fallthru
      _
    %v56 = vld [vmem:[#allocation2] sm:$0xf]
    %v57 = vld [vmem:[#allocation5] sm:$0xf]
    %v58 = vmul.f32 %v56, %v57
    %v59 = vld [vmem:[#allocation7] sm:$0xf]
    %v60 = vadd.f32 %v58, %v59
    %v61 = vlaneseq
    %vm62 = vcmp.ge.s32.totalorder %v61, 0
    %vm63 = vcmp.lt.s32.totalorder %v61, 512
    %vm64 = vmand %vm62, %vm63
    %65 = vst.msk [vmem:[#allocation8] sm:$0xf] %vm64, %v60
    // Predicated region
    $region26: #{tpu_custom_call.1} parent=1 // pred_check
      _
    $region27: #{tpu_custom_call.1} parent=1 // pred_check_branch
      %67 = sbr.rel (0) target = $region29
    $region28: #{tpu_custom_call.1} parent=1 // pred_region
      %69 = vsyncadd [#allocation4], 0
      %s71 = sshll.u32 [#allocation8], 4
      %s72 = int_to_ptr.vmem [resolvable:$true] %s71
      %s73 = sshll.u32 %s3, 4
      %s74 = int_to_ptr.hbm [resolvable:$true] %s73
      %76 = dma.vmem_to_hbm [thread:$0]  %s72, 64, %s74, [#allocation4]
    $region29: #{tpu_custom_call.1} parent=1 // pred_fallthru
      _
    // Predicated region
    $region30: #{tpu_custom_call.1} parent=1 // pred_check
      _
    $region31: #{tpu_custom_call.1} parent=1 // pred_check_branch
      %78 = sbr.rel (0) target = $region33
    $region32: #{tpu_custom_call.1} parent=1 // pred_region
      %80 = dma.done [#allocation4], 64
    $region33: #{tpu_custom_call.1} parent=1 // pred_fallthru
      _
    %81 = vsyncpa [#allocation3], 1
    %82 = vsyncpa [#allocation6], 1
    %83 = vsyncpa [#allocation4], 1

</llo_original>
